<compile_context>
chip_gen: v7x
topology: tpu7x:2x2x1
jax: 0.10.0
libtpu: 0.0.40
codegen_flags: <defaults>
</compile_context>

<pallas_src>
import math

import jax
import jax.numpy as jnp
from jax.experimental import pallas as pl
from jax.experimental.pallas import tpu as pltpu

HIDDEN = 64


def _round_up(x, m):
    return ((x + m - 1) // m) * m


def _cdiv(a, b):
    return (a + b - 1) // b


def _tpu_tile_defaults():
    """Per-generation (tile_b cap, vmem_limit_bytes).

    VMEM math per step (dominant terms, lane-padded):
      inputs: 2 blocks x 2 buffers x tile_b*128*4 B  (state + action, each padded
              to a full 128-lane tile in VMEM)
      intermediates: ~1.2 KB/row (h1/h2 f32 + bf16 copies + layer-3 operand)
    => ~3.3 KB/row: tile_b=4096 ~ 13.5 MiB, tile_b=8192 ~ 27 MiB.
    """
    kind = ""
    try:
        kind = jax.devices()[0].device_kind.lower()
    except Exception:
        pass
    if "v6" in kind:            # 128 MiB physical VMEM, plenty of headroom
        return 8192, 64 * 1024 * 1024
    if "v7" in kind:            # 64 MiB physical per TC -> cap tile and limit
        return 4096, 40 * 1024 * 1024
    # v5e / unknown: 16 MiB scoped default is the binding case -> raise it.
    return 4096, 32 * 1024 * 1024


def calcuate_net_get_num(state, action, params, *, tile_b=None):
    """state: [B, input_shape] f32, action: [B, num_action] f32 -> [B, 1] f32."""
    w1, b1, w2, b2, w3, b3 = params
    B, d_state = state.shape
    d_action = action.shape[-1]
    d_in = d_state + d_action

    # Pre-split W1 (so no concatenated [B, D_in] buffer is ever materialized in
    # HBM) and pre-cast the MXU weights to bf16 once, outside the kernel.
    action_on_vpu = d_action <= 8
    w1s = w1[:d_state].astype(jnp.bfloat16)
    w1a = w1[d_state:]
    if not action_on_vpu:
        w1a = w1a.astype(jnp.bfloat16)      # second MXU matmul needs bf16
    w2_bf = w2.astype(jnp.bfloat16)
    w3_row = w3.reshape(1, HIDDEN).astype(jnp.bfloat16)   # (64,1) -> (1,64)
    b1 = b1.reshape(1, HIDDEN).astype(jnp.float32)
    b2 = b2.reshape(1, HIDDEN).astype(jnp.float32)
    b3_s = b3.reshape(1, 1).astype(jnp.float32)

    # ---- tile sizing (per generation, bounded padding waste) ----------------
    tile_cap, vmem_limit = _tpu_tile_defaults()
    if tile_b is not None:
        tile_cap = max(128, _round_up(tile_b, 128))
    b128 = _round_up(max(B, 1), 128)          # lane-dense output => 128-multiples
    n_steps = _cdiv(b128, tile_cap)
    if n_steps == 1 and b128 >= 256:
        # >= 2 grid steps lets the "parallel" axis shard across both
        # TensorCores on v7x; negligible cost elsewhere.
        n_steps = 2
    tile = _round_up(_cdiv(b128, n_steps), 128)
    b_pad = tile * n_steps

    if b_pad != B:
        pad = b_pad - B
        state = jnp.pad(state, ((0, pad), (0, 0)))
        action = jnp.pad(action, ((0, pad), (0, 0)))

    def kernel(s_ref, a_ref, w1s_ref, w1a_ref, b1_ref, w2_ref, b2_ref,
               w3_ref, b3_ref, o_ref):
        # ---- Layer 1, state part: bf16 MXU matmul, f32 accumulation. ----
        h1 = jnp.dot(s_ref[...].astype(jnp.bfloat16), w1s_ref[...],
                     preferred_element_type=jnp.float32)

        # ---- Layer 1, action part. ----
        if action_on_vpu:
            # d_action is tiny: a handful of VPU broadcast-FMAs instead of a
            # second MXU push stream (drops MXU pushes per 8-row group 3 -> 2,
            # which is the intent of the "merge split-K" review item, without
            # an unaligned in-kernel lane concat).
            a = a_ref[...]                    # (tile, d_action) f32
            w1a_full = w1a_ref[...]           # (d_action, 64) f32
            for j in range(d_action):
                h1 = h1 + a[:, j:j + 1] * w1a_full[j:j + 1, :]
        else:
            h1 = h1 + jnp.dot(a_ref[...].astype(jnp.bfloat16), w1a_ref[...],
                              preferred_element_type=jnp.float32)
        h1 = jnp.maximum(h1 + b1_ref[...], 0.0)

        # ---- Layer 2: 64x64 bf16 MXU matmul, f32 accumulation. ----
        h2 = jnp.dot(h1.astype(jnp.bfloat16), w2_ref[...],
                     preferred_element_type=jnp.float32) + b2_ref[...]
        h2 = jnp.maximum(h2, 0.0)

        # ---- Layer 3 (64 -> 1), lane-dense output. ----
        # Contract (1,64) with (tile,64) over the feature axis -> (1, tile):
        # batch rows land on lanes, so the store and the HBM writeback DMA are
        # fully dense (no masked (tile,1) column, no 128x-inflated out buffer).
        h3 = jax.lax.dot_general(
            w3_ref[...], h2.astype(jnp.bfloat16),
            dimension_numbers=(((1,), (1,)), ((), ())),
            preferred_element_type=jnp.float32)
        o_ref[...] = jnp.maximum(h3 + b3_ref[...], 0.0)

    flops = 2 * b_pad * (d_in * HIDDEN + HIDDEN * HIDDEN + HIDDEN)
    bytes_accessed = (4 * b_pad * d_in                                  # inputs
                      + 2 * (d_in * HIDDEN + HIDDEN * HIDDEN + HIDDEN)  # bf16 weights
                      + 4 * (2 * HIDDEN + 1)                            # f32 biases
                      + 4 * b_pad)                                      # output

    out = pl.pallas_call(
        kernel,
        out_shape=jax.ShapeDtypeStruct((1, b_pad), jnp.float32),
        grid=(n_steps,),
        in_specs=[
            pl.BlockSpec((tile, d_state), lambda i: (i, 0)),    # state tile
            pl.BlockSpec((tile, d_action), lambda i: (i, 0)),   # action tile
            pl.BlockSpec((d_state, HIDDEN), lambda i: (0, 0)),  # W1[:d_state] bf16
            pl.BlockSpec((d_action, HIDDEN), lambda i: (0, 0)), # W1[d_state:]
            pl.BlockSpec((1, HIDDEN), lambda i: (0, 0)),        # b1
            pl.BlockSpec((HIDDEN, HIDDEN), lambda i: (0, 0)),   # W2 bf16
            pl.BlockSpec((1, HIDDEN), lambda i: (0, 0)),        # b2
            pl.BlockSpec((1, HIDDEN), lambda i: (0, 0)),        # w3 row bf16
            pl.BlockSpec((1, 1), lambda i: (0, 0)),             # b3
        ],
        out_specs=pl.BlockSpec((1, tile), lambda i: (0, i)),    # lane-dense rows
        compiler_params=pltpu.CompilerParams(
            dimension_semantics=("parallel",),
            vmem_limit_bytes=vmem_limit),
        cost_estimate=pl.CostEstimate(
            flops=flops, transcendentals=0, bytes_accessed=bytes_accessed),
    )(state, action, w1s, w1a, b1, w2_bf, b2, w3_row, b3_s)

    # (1, b_pad) -> (b_pad, 1) is a free row-major reshape; drop padded rows.
    return out.reshape(b_pad, 1)[:B]


def init_params(key, input_shape, num_action):
    """Deterministic init matching PyTorch nn.Linear default U(-1/sqrt(fan_in), +)."""
    d_in = input_shape + num_action
    dims = [(d_in, HIDDEN), (HIDDEN, HIDDEN), (HIDDEN, 1)]
    params = []
    for fi, fo in dims:
        kw, kb, key = jax.random.split(key, 3)
        bound = 1.0 / math.sqrt(fi)
        # Weights stored [fan_in, fan_out] (transposed vs. torch's [out, in]).
        w = jax.random.uniform(kw, (fi, fo), jnp.float32, -bound, bound)
        b = jax.random.uniform(kb, (1, fo), jnp.float32, -bound, bound)
        params.extend([w, b])
    return tuple(params)


def _reference(state, action, params):
    w1, b1, w2, b2, w3, b3 = params
    x = jnp.concatenate([state, action], axis=-1)
    h = jax.nn.relu(x @ w1 + b1)
    h = jax.nn.relu(h @ w2 + b2)
    return jax.nn.relu(h @ w3 + b3)


if __name__ == "__main__":
    key = jax.random.PRNGKey(0)
    input_shape, num_action, batch = 16, 4, 8

    kp, ks, ka = jax.random.split(key, 3)
    params = init_params(kp, input_shape, num_action)
    state = jax.random.normal(ks, (batch, input_shape), jnp.float32)
    action = jax.random.normal(ka, (batch, num_action), jnp.float32)

    out = calcuate_net_get_num(state, action, params)
    out = jax.block_until_ready(out)

    ref = _reference(state, action, params)
    assert out.shape == (batch, 1), out.shape
    # bf16 matmul operands (f32 accumulation) -> loosened tolerance vs f32 ref.
    assert jnp.allclose(out, ref, atol=2e-2, rtol=2e-2), (out, ref)
    print("KERNEL_OK")
</pallas_src>

<mosaic_0001>
module attributes {stable_mosaic.version = 11 : i64} {
  func.func @kernel(%arg0: i32, %arg1: memref<128x16xf32, #tpu.memory_space<vmem>>, %arg2: memref<128x4xf32, #tpu.memory_space<vmem>>, %arg3: memref<16x64xbf16, #tpu.memory_space<vmem>>, %arg4: memref<4x64xf32, #tpu.memory_space<vmem>>, %arg5: memref<1x64xf32, #tpu.memory_space<vmem>>, %arg6: memref<64x64xbf16, #tpu.memory_space<vmem>>, %arg7: memref<1x64xf32, #tpu.memory_space<vmem>>, %arg8: memref<1x64xbf16, #tpu.memory_space<vmem>>, %arg9: memref<1x1xf32, #tpu.memory_space<vmem>>, %arg10: memref<1x128xf32, #tpu.memory_space<vmem>>) attributes {dimension_semantics = [#tpu.dimension_semantics<parallel>], iteration_bounds = array<i64: 1>, scalar_prefetch = 0 : i64, scratch_operands = 0 : i64, tpu.core_type = #tpu.core_type<tc>, window_params = [{transform_indices = @transform_0, window_bounds = array<i64: 128, 16>}, {transform_indices = @transform_1, window_bounds = array<i64: 128, 4>}, {pipeline_mode = #tpu.pipeline_mode<synchronous>, transform_indices = @transform_2, window_bounds = array<i64: 16, 64>}, {pipeline_mode = #tpu.pipeline_mode<synchronous>, transform_indices = @transform_3, window_bounds = array<i64: 4, 64>}, {pipeline_mode = #tpu.pipeline_mode<synchronous>, transform_indices = @transform_4, window_bounds = array<i64: 1, 64>}, {pipeline_mode = #tpu.pipeline_mode<synchronous>, transform_indices = @transform_5, window_bounds = array<i64: 64, 64>}, {pipeline_mode = #tpu.pipeline_mode<synchronous>, transform_indices = @transform_6, window_bounds = array<i64: 1, 64>}, {pipeline_mode = #tpu.pipeline_mode<synchronous>, transform_indices = @transform_7, window_bounds = array<i64: 1, 64>}, {pipeline_mode = #tpu.pipeline_mode<synchronous>, transform_indices = @transform_8, window_bounds = array<i64: 1, 1>}, {transform_indices = @transform_9, window_bounds = array<i64: 1, 128>}]} {
    %c0 = arith.constant 0 : index
    %c0_0 = arith.constant 0 : index
    %0 = vector.load %arg1[%c0, %c0_0] : memref<128x16xf32, #tpu.memory_space<vmem>>, vector<128x16xf32>
    %1 = arith.truncf %0 : vector<128x16xf32> to vector<128x16xbf16>
    %c0_1 = arith.constant 0 : index
    %c0_2 = arith.constant 0 : index
    %2 = vector.load %arg3[%c0_1, %c0_2] : memref<16x64xbf16, #tpu.memory_space<vmem>>, vector<16x64xbf16>
    %cst = arith.constant dense<0.000000e+00> : vector<128x64xf32>
    %3 = tpu.matmul %1, %2, %cst {dimension_numbers = #tpu.dot_dimension_numbers<[1], [0], [0], [1], [0, 0, 1, 1], [], []>} : vector<128x16xbf16>, vector<16x64xbf16>, vector<128x64xf32> -> vector<128x64xf32>
    %c0_3 = arith.constant 0 : index
    %c0_4 = arith.constant 0 : index
    %4 = vector.load %arg2[%c0_3, %c0_4] : memref<128x4xf32, #tpu.memory_space<vmem>>, vector<128x4xf32>
    %c0_5 = arith.constant 0 : index
    %c0_6 = arith.constant 0 : index
    %5 = vector.load %arg4[%c0_5, %c0_6] : memref<4x64xf32, #tpu.memory_space<vmem>>, vector<4x64xf32>
    %6 = vector.extract_strided_slice %4 {offsets = [0, 0], sizes = [128, 1], strides = [1, 1]} : vector<128x4xf32> to vector<128x1xf32>
    %7 = vector.extract_strided_slice %5 {offsets = [0, 0], sizes = [1, 64], strides = [1, 1]} : vector<4x64xf32> to vector<1x64xf32>
    %8 = vector.broadcast %6 : vector<128x1xf32> to vector<128x64xf32>
    %9 = vector.broadcast %7 : vector<1x64xf32> to vector<128x64xf32>
    %10 = arith.mulf %8, %9 : vector<128x64xf32>
    %11 = arith.addf %3, %10 : vector<128x64xf32>
    %12 = vector.extract_strided_slice %4 {offsets = [0, 1], sizes = [128, 1], strides = [1, 1]} : vector<128x4xf32> to vector<128x1xf32>
    %13 = vector.extract_strided_slice %5 {offsets = [1, 0], sizes = [1, 64], strides = [1, 1]} : vector<4x64xf32> to vector<1x64xf32>
    %14 = vector.broadcast %12 : vector<128x1xf32> to vector<128x64xf32>
    %15 = vector.broadcast %13 : vector<1x64xf32> to vector<128x64xf32>
    %16 = arith.mulf %14, %15 : vector<128x64xf32>
    %17 = arith.addf %11, %16 : vector<128x64xf32>
    %18 = vector.extract_strided_slice %4 {offsets = [0, 2], sizes = [128, 1], strides = [1, 1]} : vector<128x4xf32> to vector<128x1xf32>
    %19 = vector.extract_strided_slice %5 {offsets = [2, 0], sizes = [1, 64], strides = [1, 1]} : vector<4x64xf32> to vector<1x64xf32>
    %20 = vector.broadcast %18 : vector<128x1xf32> to vector<128x64xf32>
    %21 = vector.broadcast %19 : vector<1x64xf32> to vector<128x64xf32>
    %22 = arith.mulf %20, %21 : vector<128x64xf32>
    %23 = arith.addf %17, %22 : vector<128x64xf32>
    %24 = vector.extract_strided_slice %4 {offsets = [0, 3], sizes = [128, 1], strides = [1, 1]} : vector<128x4xf32> to vector<128x1xf32>
    %25 = vector.extract_strided_slice %5 {offsets = [3, 0], sizes = [1, 64], strides = [1, 1]} : vector<4x64xf32> to vector<1x64xf32>
    %26 = vector.broadcast %24 : vector<128x1xf32> to vector<128x64xf32>
    %27 = vector.broadcast %25 : vector<1x64xf32> to vector<128x64xf32>
    %28 = arith.mulf %26, %27 : vector<128x64xf32>
    %29 = arith.addf %23, %28 : vector<128x64xf32>
    %c0_7 = arith.constant 0 : index
    %c0_8 = arith.constant 0 : index
    %30 = vector.load %arg5[%c0_7, %c0_8] : memref<1x64xf32, #tpu.memory_space<vmem>>, vector<1x64xf32>
    %31 = vector.broadcast %30 : vector<1x64xf32> to vector<128x64xf32>
    %32 = arith.addf %29, %31 : vector<128x64xf32>
    %cst_9 = arith.constant 0.000000e+00 : f32
    %33 = vector.broadcast %cst_9 : f32 to vector<128x64xf32>
    %34 = arith.maximumf %32, %33 : vector<128x64xf32>
    %35 = arith.truncf %34 : vector<128x64xf32> to vector<128x64xbf16>
    %c0_10 = arith.constant 0 : index
    %c0_11 = arith.constant 0 : index
    %36 = vector.load %arg6[%c0_10, %c0_11] : memref<64x64xbf16, #tpu.memory_space<vmem>>, vector<64x64xbf16>
    %cst_12 = arith.constant dense<0.000000e+00> : vector<128x64xf32>
    %37 = tpu.matmul %35, %36, %cst_12 {dimension_numbers = #tpu.dot_dimension_numbers<[1], [0], [0], [1], [0, 0, 1, 1], [], []>} : vector<128x64xbf16>, vector<64x64xbf16>, vector<128x64xf32> -> vector<128x64xf32>
    %c0_13 = arith.constant 0 : index
    %c0_14 = arith.constant 0 : index
    %38 = vector.load %arg7[%c0_13, %c0_14] : memref<1x64xf32, #tpu.memory_space<vmem>>, vector<1x64xf32>
    %39 = vector.broadcast %38 : vector<1x64xf32> to vector<128x64xf32>
    %40 = arith.addf %37, %39 : vector<128x64xf32>
    %cst_15 = arith.constant 0.000000e+00 : f32
    %41 = vector.broadcast %cst_15 : f32 to vector<128x64xf32>
    %42 = arith.maximumf %40, %41 : vector<128x64xf32>
    %c0_16 = arith.constant 0 : index
    %c0_17 = arith.constant 0 : index
    %43 = vector.load %arg8[%c0_16, %c0_17] : memref<1x64xbf16, #tpu.memory_space<vmem>>, vector<1x64xbf16>
    %44 = arith.truncf %42 : vector<128x64xf32> to vector<128x64xbf16>
    %cst_18 = arith.constant dense<0.000000e+00> : vector<1x128xf32>
    %45 = tpu.matmul %43, %44, %cst_18 {dimension_numbers = #tpu.dot_dimension_numbers<[1], [1], [0], [0], [0, 0, 1, 0], [], []>} : vector<1x64xbf16>, vector<128x64xbf16>, vector<1x128xf32> -> vector<1x128xf32>
    %c0_19 = arith.constant 0 : index
    %c0_20 = arith.constant 0 : index
    %46 = vector.load %arg9[%c0_19, %c0_20] : memref<1x1xf32, #tpu.memory_space<vmem>>, vector<1x1xf32>
    %47 = vector.broadcast %46 : vector<1x1xf32> to vector<1x128xf32>
    %48 = arith.addf %45, %47 : vector<1x128xf32>
    %cst_21 = arith.constant 0.000000e+00 : f32
    %49 = vector.broadcast %cst_21 : f32 to vector<1x128xf32>
    %50 = arith.maximumf %48, %49 : vector<1x128xf32>
    %c0_22 = arith.constant 0 : index
    %c0_23 = arith.constant 0 : index
    %51 = vector.load %arg10[%c0_22, %c0_23] : memref<1x128xf32, #tpu.memory_space<vmem>>, vector<1x128xf32>
    tpu.vector_store %arg10[%c0_22, %c0_23], %50 {strides = array<i32>} : memref<1x128xf32, #tpu.memory_space<vmem>>, vector<1x128xf32>,
    return
  }
  func.func @transform_0(%arg0: i32) -> (i32, i32) {
    %c0_i32 = arith.constant 0 : i32
    %c0_i32_0 = arith.constant 0 : i32
    return %arg0, %c0_i32 : i32, i32
  }
  func.func @transform_1(%arg0: i32) -> (i32, i32) {
    %c0_i32 = arith.constant 0 : i32
    %c0_i32_0 = arith.constant 0 : i32
    return %arg0, %c0_i32 : i32, i32
  }
  func.func @transform_2(%arg0: i32) -> (i32, i32) {
    %c0_i32 = arith.constant 0 : i32
    %c0_i32_0 = arith.constant 0 : i32
    %c0_i32_1 = arith.constant 0 : i32
    return %c0_i32, %c0_i32_0 : i32, i32
  }
  func.func @transform_3(%arg0: i32) -> (i32, i32) {
    %c0_i32 = arith.constant 0 : i32
    %c0_i32_0 = arith.constant 0 : i32
    %c0_i32_1 = arith.constant 0 : i32
    return %c0_i32, %c0_i32_0 : i32, i32
  }
  func.func @transform_4(%arg0: i32) -> (i32, i32) {
    %c0_i32 = arith.constant 0 : i32
    %c0_i32_0 = arith.constant 0 : i32
    %c0_i32_1 = arith.constant 0 : i32
    return %c0_i32, %c0_i32_0 : i32, i32
  }
  func.func @transform_5(%arg0: i32) -> (i32, i32) {
    %c0_i32 = arith.constant 0 : i32
    %c0_i32_0 = arith.constant 0 : i32
    %c0_i32_1 = arith.constant 0 : i32
    return %c0_i32, %c0_i32_0 : i32, i32
  }
  func.func @transform_6(%arg0: i32) -> (i32, i32) {
    %c0_i32 = arith.constant 0 : i32
    %c0_i32_0 = arith.constant 0 : i32
    %c0_i32_1 = arith.constant 0 : i32
    return %c0_i32, %c0_i32_0 : i32, i32
  }
  func.func @transform_7(%arg0: i32) -> (i32, i32) {
    %c0_i32 = arith.constant 0 : i32
    %c0_i32_0 = arith.constant 0 : i32
    %c0_i32_1 = arith.constant 0 : i32
    return %c0_i32, %c0_i32_0 : i32, i32
  }
  func.func @transform_8(%arg0: i32) -> (i32, i32) {
    %c0_i32 = arith.constant 0 : i32
    %c0_i32_0 = arith.constant 0 : i32
    %c0_i32_1 = arith.constant 0 : i32
    return %c0_i32, %c0_i32_0 : i32, i32
  }
  func.func @transform_9(%arg0: i32) -> (i32, i32) {
    %c0_i32 = arith.constant 0 : i32
    %c0_i32_0 = arith.constant 0 : i32
    return %c0_i32, %arg0 : i32, i32
  }
}

</mosaic_0001>

<llo_original>
// kernel: tpu_custom_call.1
$region0: #{tpu_custom_call.1}
  #allocation0 [shape = 'u32[]', space=smem, size = 0x4, offset = 0x4, fixed_abs, tag = 'smem constant byte address 0x4 - core index']
  #allocation1 [shape = 'u32[144,128]{1,0:T(1,128)}', space=vmem, size = 0x12000, scoped, tag = 'internal scratch']
  #allocation2 [shape = 'f32[1,1]{1,0:T(1,128)S(1)}', space=vmem, size = 0x200, scoped, tag = 'scoped memory for tpu_custom_call.1']
  %s0 = inlined_call_operand.vmem [shape: f32[128,16], index: 0, kind: input, shape index: {}]
  %s1 = inlined_call_operand.vmem [shape: f32[128,4], index: 1, kind: input, shape index: {}]
  %s2 = inlined_call_operand.vmem [shape: bf16[16,64], index: 2, kind: input, shape index: {}]
  %s3 = inlined_call_operand.vmem [shape: f32[4,64], index: 3, kind: input, shape index: {}]
  %s4 = inlined_call_operand.vmem [shape: f32[1,64], index: 4, kind: input, shape index: {}]
  %s5 = inlined_call_operand.vmem [shape: bf16[64,64], index: 5, kind: input, shape index: {}]
  %s6 = inlined_call_operand.vmem [shape: f32[1,64], index: 6, kind: input, shape index: {}]
  %s7 = inlined_call_operand.vmem [shape: bf16[1,64], index: 7, kind: input, shape index: {}]
  %s8 = inlined_call_operand.<no memory space> [shape: f32[1,1], index: 8, kind: input, shape index: {}]
  %s9 = inlined_call_operand.hbm [shape: f32[1,128], index: 9, kind: output, shape index: {}]
  %s10 = sld [smem:[#allocation0]]
  $region46: #{tpu_custom_call.1} parent=0
    _
  %s12 = ssub.s32 1, %s10
  %s13 = scalar_select 0, %s12, %s10
  %v14 = vstv %s8
  %15 = vst [vmem:[#allocation2] sm:$0x1] %v14
  $region1: #{tpu_custom_call.1} parent=0
    #allocation3 [shape = 'u8[512]{0}', space=vmem, size = 0x400, scoped, tag = 'output window, operand 0, single buffered']
    #allocation4 [shape = 's32[1]{0}', space=sflag, size = 0x4, scoped, tag = 'scoped memory for tpu_custom_call.1']
    %16 = vsyncpa [#allocation4], 0
    // Predicated region
    $region2: #{tpu_custom_call.1} parent=1 // pred_check
      _
    $region3: #{tpu_custom_call.1} parent=1 // pred_check_branch
      %18 = sbr.rel (0) target = $region5
    $region4: #{tpu_custom_call.1} parent=1 // pred_region
      _
    $region5: #{tpu_custom_call.1} parent=1 // pred_fallthru
      _
    // Predicated region
    $region6: #{tpu_custom_call.1} parent=1 // pred_check
      _
    $region7: #{tpu_custom_call.1} parent=1 // pred_check_branch
      %20 = sbr.rel (0) target = $region9
    $region8: #{tpu_custom_call.1} parent=1 // pred_region
      _
    $region9: #{tpu_custom_call.1} parent=1 // pred_fallthru
      _
    // Predicated region
    $region10: #{tpu_custom_call.1} parent=1 // pred_check
      _
    $region11: #{tpu_custom_call.1} parent=1 // pred_check_branch
      %22 = sbr.rel (0) target = $region13
    $region12: #{tpu_custom_call.1} parent=1 // pred_region
      _
    $region13: #{tpu_custom_call.1} parent=1 // pred_fallthru
      _
    // Predicated region
    $region14: #{tpu_custom_call.1} parent=1 // pred_check
      _
    $region15: #{tpu_custom_call.1} parent=1 // pred_check_branch
      %24 = sbr.rel (0) target = $region17
    $region16: #{tpu_custom_call.1} parent=1 // pred_region
      _
    $region17: #{tpu_custom_call.1} parent=1 // pred_fallthru
      _
    // Predicated region
    $region18: #{tpu_custom_call.1} parent=1 // pred_check
      _
    $region19: #{tpu_custom_call.1} parent=1 // pred_check_branch
      %26 = sbr.rel (0) target = $region21
    $region20: #{tpu_custom_call.1} parent=1 // pred_region
      _
    $region21: #{tpu_custom_call.1} parent=1 // pred_fallthru
      _
    // Predicated region
    $region22: #{tpu_custom_call.1} parent=1 // pred_check
      _
    $region23: #{tpu_custom_call.1} parent=1 // pred_check_branch
      %28 = sbr.rel (0) target = $region25
    $region24: #{tpu_custom_call.1} parent=1 // pred_region
      _
    $region25: #{tpu_custom_call.1} parent=1 // pred_fallthru
      _
    // Predicated region
    $region26: #{tpu_custom_call.1} parent=1 // pred_check
      _
    $region27: #{tpu_custom_call.1} parent=1 // pred_check_branch
      %30 = sbr.rel (0) target = $region29
    $region28: #{tpu_custom_call.1} parent=1 // pred_region
      _
    $region29: #{tpu_custom_call.1} parent=1 // pred_fallthru
      _
    // Predicated region
    $region30: #{tpu_custom_call.1} parent=1 // pred_check
      _
    $region31: #{tpu_custom_call.1} parent=1 // pred_check_branch
      %32 = sbr.rel (0) target = $region33
    $region32: #{tpu_custom_call.1} parent=1 // pred_region
      _
    $region33: #{tpu_custom_call.1} parent=1 // pred_fallthru
      _
    // Predicated region
    $region34: #{tpu_custom_call.1} parent=1 // pred_check
      _
    $region35: #{tpu_custom_call.1} parent=1 // pred_check_branch
      %34 = sbr.rel (0) target = $region37
    $region36: #{tpu_custom_call.1} parent=1 // pred_region
      _
    $region37: #{tpu_custom_call.1} parent=1 // pred_fallthru
      _
    %v36 = vld [vmem:[%s0] sm:$0xff]
    %v37 = vld [vmem:[%s0 + $0x8] sm:$0xff]
    %v38 = vld [vmem:[%s0 + $0x10] sm:$0xff]
    %v39 = vld [vmem:[%s0 + $0x18] sm:$0xff]
    %v40 = vld [vmem:[%s0 + $0x20] sm:$0xff]
    %v41 = vld [vmem:[%s0 + $0x28] sm:$0xff]
    %v42 = vld [vmem:[%s0 + $0x30] sm:$0xff]
    %v43 = vld [vmem:[%s0 + $0x38] sm:$0xff]
    %v44 = vld [vmem:[%s0 + $0x40] sm:$0xff]
    %v45 = vld [vmem:[%s0 + $0x48] sm:$0xff]
    %v46 = vld [vmem:[%s0 + $0x50] sm:$0xff]
    %v47 = vld [vmem:[%s0 + $0x58] sm:$0xff]
    %v48 = vld [vmem:[%s0 + $0x60] sm:$0xff]
    %v49 = vld [vmem:[%s0 + $0x68] sm:$0xff]
    %v50 = vld [vmem:[%s0 + $0x70] sm:$0xff]
    %v51 = vld [vmem:[%s0 + $0x78] sm:$0xff]
    %v52 = vpack.c.bf16 %v37, %v36
    %v53 = vpack.c.bf16 %v39, %v38
    %v54 = vpack.c.bf16 %v41, %v40
    %v55 = vpack.c.bf16 %v43, %v42
    %v56 = vpack.c.bf16 %v45, %v44
    %v57 = vpack.c.bf16 %v47, %v46
    %v58 = vpack.c.bf16 %v49, %v48
    %v59 = vpack.c.bf16 %v51, %v50
    %v60 = vld [vmem:[%s2] sm:$0xf]
    %v61 = vld [vmem:[%s2 + $0x4] sm:$0xf]
    %v62 = vld [vmem:[%s1] sm:$0xff]
    %v63 = vld [vmem:[%s1 + $0x8] sm:$0xff]
    %v64 = vld [vmem:[%s1 + $0x10] sm:$0xff]
    %v65 = vld [vmem:[%s1 + $0x18] sm:$0xff]
    %v66 = vld [vmem:[%s1 + $0x20] sm:$0xff]
    %v67 = vld [vmem:[%s1 + $0x28] sm:$0xff]
    %v68 = vld [vmem:[%s1 + $0x30] sm:$0xff]
    %v69 = vld [vmem:[%s1 + $0x38] sm:$0xff]
    %v70 = vld [vmem:[%s1 + $0x40] sm:$0xff]
    %v71 = vld [vmem:[%s1 + $0x48] sm:$0xff]
    %v72 = vld [vmem:[%s1 + $0x50] sm:$0xff]
    %v73 = vld [vmem:[%s1 + $0x58] sm:$0xff]
    %v74 = vld [vmem:[%s1 + $0x60] sm:$0xff]
    %v75 = vld [vmem:[%s1 + $0x68] sm:$0xff]
    %v76 = vld [vmem:[%s1 + $0x70] sm:$0xff]
    %v77 = vld [vmem:[%s1 + $0x78] sm:$0xff]
    %v78 = vld [vmem:[%s3] sm:$0xf]
    %80 = vset.pattern.permute.xlu0 0
    %81 = vperm.xlu0 %80, %v62
    %v82 = vpop.permute.xlu0 %81
    %85 = vset.pattern.permute.xlu0 0
    %86 = vperm.xlu0 %85, %v63
    %v87 = vpop.permute.xlu0 %86
    %90 = vset.pattern.permute.xlu0 0
    %91 = vperm.xlu0 %90, %v64
    %v92 = vpop.permute.xlu0 %91
    %95 = vset.pattern.permute.xlu0 0
    %96 = vperm.xlu0 %95, %v65
    %v97 = vpop.permute.xlu0 %96
    %100 = vset.pattern.permute.xlu0 0
    %101 = vperm.xlu0 %100, %v66
    %v102 = vpop.permute.xlu0 %101
    %105 = vset.pattern.permute.xlu0 0
    %106 = vperm.xlu0 %105, %v67
    %v107 = vpop.permute.xlu0 %106
    %110 = vset.pattern.permute.xlu0 0
    %111 = vperm.xlu0 %110, %v68
    %v112 = vpop.permute.xlu0 %111
    %115 = vset.pattern.permute.xlu0 0
    %116 = vperm.xlu0 %115, %v69
    %v117 = vpop.permute.xlu0 %116
    %120 = vset.pattern.permute.xlu0 0
    %121 = vperm.xlu0 %120, %v70
    %v122 = vpop.permute.xlu0 %121
    %125 = vset.pattern.permute.xlu0 0
    %126 = vperm.xlu0 %125, %v71
    %v127 = vpop.permute.xlu0 %126
    %130 = vset.pattern.permute.xlu0 0
    %131 = vperm.xlu0 %130, %v72
    %v132 = vpop.permute.xlu0 %131
    %135 = vset.pattern.permute.xlu0 0
    %136 = vperm.xlu0 %135, %v73
    %v137 = vpop.permute.xlu0 %136
    %140 = vset.pattern.permute.xlu0 0
    %141 = vperm.xlu0 %140, %v74
    %v142 = vpop.permute.xlu0 %141
    %145 = vset.pattern.permute.xlu0 0
    %146 = vperm.xlu0 %145, %v75
    %v147 = vpop.permute.xlu0 %146
    %150 = vset.pattern.permute.xlu0 0
    %151 = vperm.xlu0 %150, %v76
    %v152 = vpop.permute.xlu0 %151
    %155 = vset.pattern.permute.xlu0 0
    %156 = vperm.xlu0 %155, %v77
    %v157 = vpop.permute.xlu0 %156
    %v159 = vlaneseq
    %v160 = vshrl.u32 %v159, 7
    %v161 = vsub.s32 0, %v160
    %v162 = vrot.slane %v78, %v161
    %v163 = vmul.f32 %v82, %v162
    %v164 = vmul.f32 %v87, %v162
    %v165 = vmul.f32 %v92, %v162
    %v166 = vmul.f32 %v97, %v162
    %v167 = vmul.f32 %v102, %v162
    %v168 = vmul.f32 %v107, %v162
    %v169 = vmul.f32 %v112, %v162
    %v170 = vmul.f32 %v117, %v162
    %v171 = vmul.f32 %v122, %v162
    %v172 = vmul.f32 %v127, %v162
    %v173 = vmul.f32 %v132, %v162
    %v174 = vmul.f32 %v137, %v162
    %v175 = vmul.f32 %v142, %v162
    %v176 = vmul.f32 %v147, %v162
    %v177 = vmul.f32 %v152, %v162
    %v178 = vmul.f32 %v157, %v162
    %v181 = vunpack.c.l.b16 %v60
    %v182 = vunpack.c.l.b16 %v61
    %v183 = vpack.c.b16 %v182, %v181
    %vm185 = vcmask 130048
    %v187 = vsel %vm185, %v52, 0
    %v190 = vsel %vm185, %v53, 0
    %v193 = vsel %vm185, %v54, 0
    %v196 = vsel %vm185, %v55, 0
    %v199 = vsel %vm185, %v56, 0
    %v202 = vsel %vm185, %v57, 0
    %v205 = vsel %vm185, %v58, 0
    %v208 = vsel %vm185, %v59, 0
    %210 = vmatprep.subr.bf16.mxu0 0
    %211 = vmatpush1.bf16.msra.mxu0 %v183
    %212 = vmatprep.subr.bf16.mxu0 0
    %213 = vmatpush1.bf16.msra.mxu0 0
    %214 = vmatprep.subr.bf16.mxu0 0
    %215 = vmatpush1.bf16.msra.mxu0 0
    %216 = vmatprep.subr.bf16.mxu0 0
    %217 = vmatpush1.bf16.msra.mxu0 0
    %218 = vmatprep.subr.bf16.mxu0 0
    %219 = vmatpush1.bf16.msra.mxu0 0
    %220 = vmatprep.subr.bf16.mxu0 0
    %221 = vmatpush1.bf16.msra.mxu0 0
    %222 = vmatprep.subr.bf16.mxu0 0
    %223 = vmatpush1.bf16.msra.mxu0 0
    %224 = vmatprep.subr.bf16.mxu0 0
    %225 = vmatpush1.bf16.msra.mxu0 0
    %226 = vmatprep.subr.bf16.mxu0 0
    %227 = vmatpush1.bf16.msra.mxu0 0
    %228 = vmatprep.subr.bf16.mxu0 0
    %229 = vmatpush1.bf16.msra.mxu0 0
    %230 = vmatprep.subr.bf16.mxu0 0
    %231 = vmatpush1.bf16.msra.mxu0 0
    %232 = vmatprep.subr.bf16.mxu0 0
    %233 = vmatpush1.bf16.msra.mxu0 0
    %234 = vmatprep.subr.bf16.mxu0 0
    %235 = vmatpush1.bf16.msra.mxu0 0
    %236 = vmatprep.subr.bf16.mxu0 0
    %237 = vmatpush1.bf16.msra.mxu0 0
    %238 = vmatprep.subr.bf16.mxu0 0
    %239 = vmatpush1.bf16.msra.mxu0 0
    %240 = vmatprep.subr.bf16.mxu0 0
    %241 = vmatpush1.bf16.msra.mxu0 0
    %242 = vmatprep.mubr.bf16.mxu0 0
    %243 = vmatmul.mubr.bf16.gmra.mrb[0].mxu0 %v187
    %v244 = vpop.f32.mrb[0].mxu0
    %v245 = vadd.f32 %v163, %v244
    %v246 = vpop.f32.mrb[0].mxu0
    %v247 = vpop.f32.mrb[0].mxu0
    %v248 = vadd.f32 %v164, %v247
    %v249 = vpop.f32.mrb[0].mxu0
    %250 = vmatprep.mubr.bf16.mxu0 0
    %251 = vmatmul.mubr.bf16.gmra.mrb[0].mxu0 %v190
    %v252 = vpop.f32.mrb[0].mxu0
    %v253 = vadd.f32 %v165, %v252
    %v254 = vpop.f32.mrb[0].mxu0
    %v255 = vpop.f32.mrb[0].mxu0
    %v256 = vadd.f32 %v166, %v255
    %v257 = vpop.f32.mrb[0].mxu0
    %258 = vmatprep.mubr.bf16.mxu0 0
    %259 = vmatmul.mubr.bf16.gmra.mrb[0].mxu0 %v193
    %v260 = vpop.f32.mrb[0].mxu0
    %v261 = vadd.f32 %v167, %v260
    %v262 = vpop.f32.mrb[0].mxu0
    %v263 = vpop.f32.mrb[0].mxu0
    %v264 = vadd.f32 %v168, %v263
    %v265 = vpop.f32.mrb[0].mxu0
    %266 = vmatprep.mubr.bf16.mxu0 0
    %267 = vmatmul.mubr.bf16.gmra.mrb[0].mxu0 %v196
    %v268 = vpop.f32.mrb[0].mxu0
    %v269 = vadd.f32 %v169, %v268
    %v270 = vpop.f32.mrb[0].mxu0
    %v271 = vpop.f32.mrb[0].mxu0
    %v272 = vadd.f32 %v170, %v271
    %v273 = vpop.f32.mrb[0].mxu0
    %274 = vmatprep.mubr.bf16.mxu0 0
    %275 = vmatmul.mubr.bf16.gmra.mrb[0].mxu0 %v199
    %v276 = vpop.f32.mrb[0].mxu0
    %v277 = vadd.f32 %v171, %v276
    %v278 = vpop.f32.mrb[0].mxu0
    %v279 = vpop.f32.mrb[0].mxu0
    %v280 = vadd.f32 %v172, %v279
    %v281 = vpop.f32.mrb[0].mxu0
    %282 = vmatprep.mubr.bf16.mxu0 0
    %283 = vmatmul.mubr.bf16.gmra.mrb[0].mxu0 %v202
    %v284 = vpop.f32.mrb[0].mxu0
    %v285 = vadd.f32 %v173, %v284
    %v286 = vpop.f32.mrb[0].mxu0
    %v287 = vpop.f32.mrb[0].mxu0
    %v288 = vadd.f32 %v174, %v287
    %v289 = vpop.f32.mrb[0].mxu0
    %290 = vmatprep.mubr.bf16.mxu0 0
    %291 = vmatmul.mubr.bf16.gmra.mrb[0].mxu0 %v205
    %v292 = vpop.f32.mrb[0].mxu0
    %v293 = vadd.f32 %v175, %v292
    %v294 = vpop.f32.mrb[0].mxu0
    %v295 = vpop.f32.mrb[0].mxu0
    %v296 = vadd.f32 %v176, %v295
    %v297 = vpop.f32.mrb[0].mxu0
    %298 = vmatprep.mubr.bf16.mxu0 0
    %299 = vmatmul.mubr.bf16.gmra.mrb[0].mxu0 %v208
    %v300 = vpop.f32.mrb[0].mxu0
    %v301 = vadd.f32 %v177, %v300
    %v302 = vpop.f32.mrb[0].mxu0
    %v303 = vpop.f32.mrb[0].mxu0
    %v304 = vadd.f32 %v178, %v303
    %v305 = vpop.f32.mrb[0].mxu0
    %306 = vdwg.mxu0
    %307 = vset.pattern.permute.xlu0 1
    %308 = vperm.xlu0 %307, %v62
    %v309 = vpop.permute.xlu0 %308
    %311 = vset.pattern.permute.xlu0 1
    %312 = vperm.xlu0 %311, %v63
    %v313 = vpop.permute.xlu0 %312
    %315 = vset.pattern.permute.xlu0 1
    %316 = vperm.xlu0 %315, %v64
    %v317 = vpop.permute.xlu0 %316
    %319 = vset.pattern.permute.xlu0 1
    %320 = vperm.xlu0 %319, %v65
    %v321 = vpop.permute.xlu0 %320
    %323 = vset.pattern.permute.xlu0 1
    %324 = vperm.xlu0 %323, %v66
    %v325 = vpop.permute.xlu0 %324
    %327 = vset.pattern.permute.xlu0 1
    %328 = vperm.xlu0 %327, %v67
    %v329 = vpop.permute.xlu0 %328
    %331 = vset.pattern.permute.xlu0 1
    %332 = vperm.xlu0 %331, %v68
    %v333 = vpop.permute.xlu0 %332
    %335 = vset.pattern.permute.xlu0 1
    %336 = vperm.xlu0 %335, %v69
    %v337 = vpop.permute.xlu0 %336
    %339 = vset.pattern.permute.xlu0 1
    %340 = vperm.xlu0 %339, %v70
    %v341 = vpop.permute.xlu0 %340
    %343 = vset.pattern.permute.xlu0 1
    %344 = vperm.xlu0 %343, %v71
    %v345 = vpop.permute.xlu0 %344
    %347 = vset.pattern.permute.xlu0 1
    %348 = vperm.xlu0 %347, %v72
    %v349 = vpop.permute.xlu0 %348
    %351 = vset.pattern.permute.xlu0 1
    %352 = vperm.xlu0 %351, %v73
    %v353 = vpop.permute.xlu0 %352
    %355 = vset.pattern.permute.xlu0 1
    %356 = vperm.xlu0 %355, %v74
    %v357 = vpop.permute.xlu0 %356
    %359 = vset.pattern.permute.xlu0 1
    %360 = vperm.xlu0 %359, %v75
    %v361 = vpop.permute.xlu0 %360
    %363 = vset.pattern.permute.xlu0 1
    %364 = vperm.xlu0 %363, %v76
    %v365 = vpop.permute.xlu0 %364
    %367 = vset.pattern.permute.xlu0 1
    %368 = vperm.xlu0 %367, %v77
    %v369 = vpop.permute.xlu0 %368
    %v371 = vlaneseq
    %v372 = vshrl.u32 %v371, 7
    %v373 = vsub.s32 1, %v372
    %v374 = vrot.slane %v78, %v373
    %v375 = vmul.f32 %v309, %v374
    %v376 = vmul.f32 %v313, %v374
    %v377 = vmul.f32 %v317, %v374
    %v378 = vmul.f32 %v321, %v374
    %v379 = vmul.f32 %v325, %v374
    %v380 = vmul.f32 %v329, %v374
    %v381 = vmul.f32 %v333, %v374
    %v382 = vmul.f32 %v337, %v374
    %v383 = vmul.f32 %v341, %v374
    %v384 = vmul.f32 %v345, %v374
    %v385 = vmul.f32 %v349, %v374
    %v386 = vmul.f32 %v353, %v374
    %v387 = vmul.f32 %v357, %v374
    %v388 = vmul.f32 %v361, %v374
    %v389 = vmul.f32 %v365, %v374
    %v390 = vmul.f32 %v369, %v374
    %v391 = vadd.f32 %v245, %v375
    %v392 = vadd.f32 %v248, %v376
    %v393 = vadd.f32 %v253, %v377
    %v394 = vadd.f32 %v256, %v378
    %v395 = vadd.f32 %v261, %v379
    %v396 = vadd.f32 %v264, %v380
    %v397 = vadd.f32 %v269, %v381
    %v398 = vadd.f32 %v272, %v382
    %v399 = vadd.f32 %v277, %v383
    %v400 = vadd.f32 %v280, %v384
    %v401 = vadd.f32 %v285, %v385
    %v402 = vadd.f32 %v288, %v386
    %v403 = vadd.f32 %v293, %v387
    %v404 = vadd.f32 %v296, %v388
    %v405 = vadd.f32 %v301, %v389
    %v406 = vadd.f32 %v304, %v390
    %407 = vset.pattern.permute.xlu0 2
    %408 = vperm.xlu0 %407, %v62
    %v409 = vpop.permute.xlu0 %408
    %411 = vset.pattern.permute.xlu0 2
    %412 = vperm.xlu0 %411, %v63
    %v413 = vpop.permute.xlu0 %412
    %415 = vset.pattern.permute.xlu0 2
    %416 = vperm.xlu0 %415, %v64
    %v417 = vpop.permute.xlu0 %416
    %419 = vset.pattern.permute.xlu0 2
    %420 = vperm.xlu0 %419, %v65
    %v421 = vpop.permute.xlu0 %420
    %423 = vset.pattern.permute.xlu0 2
    %424 = vperm.xlu0 %423, %v66
    %v425 = vpop.permute.xlu0 %424
    %427 = vset.pattern.permute.xlu0 2
    %428 = vperm.xlu0 %427, %v67
    %v429 = vpop.permute.xlu0 %428
    %431 = vset.pattern.permute.xlu0 2
    %432 = vperm.xlu0 %431, %v68
    %v433 = vpop.permute.xlu0 %432
    %435 = vset.pattern.permute.xlu0 2
    %436 = vperm.xlu0 %435, %v69
    %v437 = vpop.permute.xlu0 %436
    %439 = vset.pattern.permute.xlu0 2
    %440 = vperm.xlu0 %439, %v70
    %v441 = vpop.permute.xlu0 %440
    %443 = vset.pattern.permute.xlu0 2
    %444 = vperm.xlu0 %443, %v71
    %v445 = vpop.permute.xlu0 %444
    %447 = vset.pattern.permute.xlu0 2
    %448 = vperm.xlu0 %447, %v72
    %v449 = vpop.permute.xlu0 %448
    %451 = vset.pattern.permute.xlu0 2
    %452 = vperm.xlu0 %451, %v73
    %v453 = vpop.permute.xlu0 %452
    %455 = vset.pattern.permute.xlu0 2
    %456 = vperm.xlu0 %455, %v74
    %v457 = vpop.permute.xlu0 %456
    %459 = vset.pattern.permute.xlu0 2
    %460 = vperm.xlu0 %459, %v75
    %v461 = vpop.permute.xlu0 %460
    %463 = vset.pattern.permute.xlu0 2
    %464 = vperm.xlu0 %463, %v76
    %v465 = vpop.permute.xlu0 %464
    %467 = vset.pattern.permute.xlu0 2
    %468 = vperm.xlu0 %467, %v77
    %v469 = vpop.permute.xlu0 %468
    %v471 = vlaneseq
    %v472 = vshrl.u32 %v471, 7
    %v473 = vsub.s32 2, %v472
    %v474 = vrot.slane %v78, %v473
    %v475 = vmul.f32 %v409, %v474
    %v476 = vmul.f32 %v413, %v474
    %v477 = vmul.f32 %v417, %v474
    %v478 = vmul.f32 %v421, %v474
    %v479 = vmul.f32 %v425, %v474
    %v480 = vmul.f32 %v429, %v474
    %v481 = vmul.f32 %v433, %v474
    %v482 = vmul.f32 %v437, %v474
    %v483 = vmul.f32 %v441, %v474
    %v484 = vmul.f32 %v445, %v474
    %v485 = vmul.f32 %v449, %v474
    %v486 = vmul.f32 %v453, %v474
    %v487 = vmul.f32 %v457, %v474
    %v488 = vmul.f32 %v461, %v474
    %v489 = vmul.f32 %v465, %v474
    %v490 = vmul.f32 %v469, %v474
    %v491 = vadd.f32 %v391, %v475
    %v492 = vadd.f32 %v392, %v476
    %v493 = vadd.f32 %v393, %v477
    %v494 = vadd.f32 %v394, %v478
    %v495 = vadd.f32 %v395, %v479
    %v496 = vadd.f32 %v396, %v480
    %v497 = vadd.f32 %v397, %v481
    %v498 = vadd.f32 %v398, %v482
    %v499 = vadd.f32 %v399, %v483
    %v500 = vadd.f32 %v400, %v484
    %v501 = vadd.f32 %v401, %v485
    %v502 = vadd.f32 %v402, %v486
    %v503 = vadd.f32 %v403, %v487
    %v504 = vadd.f32 %v404, %v488
    %v505 = vadd.f32 %v405, %v489
    %v506 = vadd.f32 %v406, %v490
    %507 = vset.pattern.permute.xlu0 3
    %508 = vperm.xlu0 %507, %v62
    %v509 = vpop.permute.xlu0 %508
    %511 = vset.pattern.permute.xlu0 3
    %512 = vperm.xlu0 %511, %v63
    %v513 = vpop.permute.xlu0 %512
    %515 = vset.pattern.permute.xlu0 3
    %516 = vperm.xlu0 %515, %v64
    %v517 = vpop.permute.xlu0 %516
    %519 = vset.pattern.permute.xlu0 3
    %520 = vperm.xlu0 %519, %v65
    %v521 = vpop.permute.xlu0 %520
    %523 = vset.pattern.permute.xlu0 3
    %524 = vperm.xlu0 %523, %v66
    %v525 = vpop.permute.xlu0 %524
    %527 = vset.pattern.permute.xlu0 3
    %528 = vperm.xlu0 %527, %v67
    %v529 = vpop.permute.xlu0 %528
    %531 = vset.pattern.permute.xlu0 3
    %532 = vperm.xlu0 %531, %v68
    %v533 = vpop.permute.xlu0 %532
    %535 = vset.pattern.permute.xlu0 3
    %536 = vperm.xlu0 %535, %v69
    %v537 = vpop.permute.xlu0 %536
    %539 = vset.pattern.permute.xlu0 3
    %540 = vperm.xlu0 %539, %v70
    %v541 = vpop.permute.xlu0 %540
    %543 = vset.pattern.permute.xlu0 3
    %544 = vperm.xlu0 %543, %v71
    %v545 = vpop.permute.xlu0 %544
    %547 = vset.pattern.permute.xlu0 3
    %548 = vperm.xlu0 %547, %v72
    %v549 = vpop.permute.xlu0 %548
    %551 = vset.pattern.permute.xlu0 3
    %552 = vperm.xlu0 %551, %v73
    %v553 = vpop.permute.xlu0 %552
    %555 = vset.pattern.permute.xlu0 3
    %556 = vperm.xlu0 %555, %v74
    %v557 = vpop.permute.xlu0 %556
    %559 = vset.pattern.permute.xlu0 3
    %560 = vperm.xlu0 %559, %v75
    %v561 = vpop.permute.xlu0 %560
    %563 = vset.pattern.permute.xlu0 3
    %564 = vperm.xlu0 %563, %v76
    %v565 = vpop.permute.xlu0 %564
    %567 = vset.pattern.permute.xlu0 3
    %568 = vperm.xlu0 %567, %v77
    %v569 = vpop.permute.xlu0 %568
    %v571 = vlaneseq
    %v572 = vshrl.u32 %v571, 7
    %v573 = vsub.s32 3, %v572
    %v574 = vrot.slane %v78, %v573
    %v575 = vmul.f32 %v509, %v574
    %v576 = vmul.f32 %v513, %v574
    %v577 = vmul.f32 %v517, %v574
    %v578 = vmul.f32 %v521, %v574
    %v579 = vmul.f32 %v525, %v574
    %v580 = vmul.f32 %v529, %v574
    %v581 = vmul.f32 %v533, %v574
    %v582 = vmul.f32 %v537, %v574
    %v583 = vmul.f32 %v541, %v574
    %v584 = vmul.f32 %v545, %v574
    %v585 = vmul.f32 %v549, %v574
    %v586 = vmul.f32 %v553, %v574
    %v587 = vmul.f32 %v557, %v574
    %v588 = vmul.f32 %v561, %v574
    %v589 = vmul.f32 %v565, %v574
    %v590 = vmul.f32 %v569, %v574
    %v591 = vadd.f32 %v491, %v575
    %v592 = vadd.f32 %v492, %v576
    %v593 = vadd.f32 %v493, %v577
    %v594 = vadd.f32 %v494, %v578
    %v595 = vadd.f32 %v495, %v579
    %v596 = vadd.f32 %v496, %v580
    %v597 = vadd.f32 %v497, %v581
    %v598 = vadd.f32 %v498, %v582
    %v599 = vadd.f32 %v499, %v583
    %v600 = vadd.f32 %v500, %v584
    %v601 = vadd.f32 %v501, %v585
    %v602 = vadd.f32 %v502, %v586
    %v603 = vadd.f32 %v503, %v587
    %v604 = vadd.f32 %v504, %v588
    %v605 = vadd.f32 %v505, %v589
    %v606 = vadd.f32 %v506, %v590
    %v607 = vld [vmem:[%s4] sm:$0x1]
    %v609 = vlaneseq
    %v610 = vshrl.u32 %v609, 7
    %v611 = vsub.s32 0, %v610
    %v612 = vrot.slane %v607, %v611
    %v614 = vadd.f32 %v591, %v612
    %v615 = vadd.f32 %v592, %v612
    %v616 = vadd.f32 %v593, %v612
    %v617 = vadd.f32 %v594, %v612
    %v618 = vadd.f32 %v595, %v612
    %v619 = vadd.f32 %v596, %v612
    %v620 = vadd.f32 %v597, %v612
    %v621 = vadd.f32 %v598, %v612
    %v622 = vadd.f32 %v599, %v612
    %v623 = vadd.f32 %v600, %v612
    %v624 = vadd.f32 %v601, %v612
    %v625 = vadd.f32 %v602, %v612
    %v626 = vadd.f32 %v603, %v612
    %v627 = vadd.f32 %v604, %v612
    %v628 = vadd.f32 %v605, %v612
    %v629 = vadd.f32 %v606, %v612
    %v630 = vmax.f32 %v614, 0.0
    %v631 = vmax.f32 %v615, 0.0
    %v632 = vmax.f32 %v616, 0.0
    %v633 = vmax.f32 %v617, 0.0
    %v634 = vmax.f32 %v618, 0.0
    %v635 = vmax.f32 %v619, 0.0
    %v636 = vmax.f32 %v620, 0.0
    %v637 = vmax.f32 %v621, 0.0
    %v638 = vmax.f32 %v622, 0.0
    %v639 = vmax.f32 %v623, 0.0
    %v640 = vmax.f32 %v624, 0.0
    %v641 = vmax.f32 %v625, 0.0
    %v642 = vmax.f32 %v626, 0.0
    %v643 = vmax.f32 %v627, 0.0
    %v644 = vmax.f32 %v628, 0.0
    %v645 = vmax.f32 %v629, 0.0
    %v646 = vpack.c.bf16 %v631, %v630
    %v647 = vpack.c.bf16 %v633, %v632
    %v648 = vpack.c.bf16 %v635, %v634
    %v649 = vpack.c.bf16 %v637, %v636
    %v650 = vpack.c.bf16 %v639, %v638
    %v651 = vpack.c.bf16 %v641, %v640
    %v652 = vpack.c.bf16 %v643, %v642
    %v653 = vpack.c.bf16 %v645, %v644
    %v654 = vld [vmem:[%s5] sm:$0xf]
    %v655 = vld [vmem:[%s5 + $0x4] sm:$0xf]
    %v656 = vld [vmem:[%s5 + $0x8] sm:$0xf]
    %v657 = vld [vmem:[%s5 + $0xc] sm:$0xf]
    %v658 = vld [vmem:[%s5 + $0x10] sm:$0xf]
    %v659 = vld [vmem:[%s5 + $0x14] sm:$0xf]
    %v660 = vld [vmem:[%s5 + $0x18] sm:$0xf]
    %v661 = vld [vmem:[%s5 + $0x1c] sm:$0xf]
    %v662 = vld [vmem:[%s6] sm:$0x1]
    %v664 = vlaneseq
    %v665 = vshrl.u32 %v664, 7
    %v666 = vsub.s32 0, %v665
    %v667 = vrot.slane %v662, %v666
    %v677 = vunpack.c.l.b16 %v654
    %v678 = vunpack.c.l.b16 %v655
    %v679 = vunpack.c.l.b16 %v656
    %v680 = vunpack.c.l.b16 %v657
    %v681 = vunpack.c.l.b16 %v658
    %v682 = vunpack.c.l.b16 %v659
    %v683 = vunpack.c.l.b16 %v660
    %v684 = vunpack.c.l.b16 %v661
    %v685 = vpack.c.b16 %v678, %v677
    %v686 = vpack.c.b16 %v680, %v679
    %v687 = vpack.c.b16 %v682, %v681
    %v688 = vpack.c.b16 %v684, %v683
    %vm693 = vcmask 523264
    %v695 = vsel %vm693, %v646, 0
    %v698 = vsel %vm693, %v647, 0
    %v701 = vsel %vm693, %v648, 0
    %v704 = vsel %vm693, %v649, 0
    %v707 = vsel %vm693, %v650, 0
    %v710 = vsel %vm693, %v651, 0
    %v713 = vsel %vm693, %v652, 0
    %v716 = vsel %vm693, %v653, 0
    %718 = vmatprep.subr.bf16.mxu0 0
    %719 = vmatpush1.bf16.msra.mxu0 %v685
    %720 = vmatprep.subr.bf16.mxu0 0
    %721 = vmatpush1.bf16.msra.mxu0 %v686
    %722 = vmatprep.subr.bf16.mxu0 0
    %723 = vmatpush1.bf16.msra.mxu0 %v687
    %724 = vmatprep.subr.bf16.mxu0 0
    %725 = vmatpush1.bf16.msra.mxu0 %v688
    %726 = vmatprep.subr.bf16.mxu0 0
    %727 = vmatpush1.bf16.msra.mxu0 0
    %728 = vmatprep.subr.bf16.mxu0 0
    %729 = vmatpush1.bf16.msra.mxu0 0
    %730 = vmatprep.subr.bf16.mxu0 0
    %731 = vmatpush1.bf16.msra.mxu0 0
    %732 = vmatprep.subr.bf16.mxu0 0
    %733 = vmatpush1.bf16.msra.mxu0 0
    %734 = vmatprep.subr.bf16.mxu0 0
    %735 = vmatpush1.bf16.msra.mxu0 0
    %736 = vmatprep.subr.bf16.mxu0 0
    %737 = vmatpush1.bf16.msra.mxu0 0
    %738 = vmatprep.subr.bf16.mxu0 0
    %739 = vmatpush1.bf16.msra.mxu0 0
    %740 = vmatprep.subr.bf16.mxu0 0
    %741 = vmatpush1.bf16.msra.mxu0 0
    %742 = vmatprep.subr.bf16.mxu0 0
    %743 = vmatpush1.bf16.msra.mxu0 0
    %744 = vmatprep.subr.bf16.mxu0 0
    %745 = vmatpush1.bf16.msra.mxu0 0
    %746 = vmatprep.subr.bf16.mxu0 0
    %747 = vmatpush1.bf16.msra.mxu0 0
    %748 = vmatprep.subr.bf16.mxu0 0
    %749 = vmatpush1.bf16.msra.mxu0 0
    %750 = vmatprep.mubr.bf16.mxu0 0
    %751 = vmatmul.mubr.bf16.gmra.mrb[0].mxu0 %v695
    %v752 = vpop.f32.mrb[0].mxu0
    %v753 = vadd.f32 %v667, %v752
    %v754 = vpop.f32.mrb[0].mxu0
    %v755 = vpop.f32.mrb[0].mxu0
    %v756 = vadd.f32 %v667, %v755
    %v757 = vpop.f32.mrb[0].mxu0
    %758 = vmatprep.mubr.bf16.mxu0 0
    %759 = vmatmul.mubr.bf16.gmra.mrb[0].mxu0 %v698
    %v760 = vpop.f32.mrb[0].mxu0
    %v761 = vadd.f32 %v667, %v760
    %v762 = vpop.f32.mrb[0].mxu0
    %v763 = vpop.f32.mrb[0].mxu0
    %v764 = vadd.f32 %v667, %v763
    %v765 = vpop.f32.mrb[0].mxu0
    %766 = vmatprep.mubr.bf16.mxu0 0
    %767 = vmatmul.mubr.bf16.gmra.mrb[0].mxu0 %v701
    %v768 = vpop.f32.mrb[0].mxu0
    %v769 = vadd.f32 %v667, %v768
    %v770 = vpop.f32.mrb[0].mxu0
    %v771 = vpop.f32.mrb[0].mxu0
    %v772 = vadd.f32 %v667, %v771
    %v773 = vpop.f32.mrb[0].mxu0
    %774 = vmatprep.mubr.bf16.mxu0 0
    %775 = vmatmul.mubr.bf16.gmra.mrb[0].mxu0 %v704
    %v776 = vpop.f32.mrb[0].mxu0
    %v777 = vadd.f32 %v667, %v776
    %v778 = vpop.f32.mrb[0].mxu0
    %v779 = vpop.f32.mrb[0].mxu0
    %v780 = vadd.f32 %v667, %v779
    %v781 = vpop.f32.mrb[0].mxu0
    %782 = vmatprep.mubr.bf16.mxu0 0
    %783 = vmatmul.mubr.bf16.gmra.mrb[0].mxu0 %v707
    %v784 = vpop.f32.mrb[0].mxu0
    %v785 = vadd.f32 %v667, %v784
    %v786 = vpop.f32.mrb[0].mxu0
    %v787 = vpop.f32.mrb[0].mxu0
    %v788 = vadd.f32 %v667, %v787
    %v789 = vpop.f32.mrb[0].mxu0
    %790 = vmatprep.mubr.bf16.mxu0 0
    %791 = vmatmul.mubr.bf16.gmra.mrb[0].mxu0 %v710
    %v792 = vpop.f32.mrb[0].mxu0
    %v793 = vadd.f32 %v667, %v792
    %v794 = vpop.f32.mrb[0].mxu0
    %v795 = vpop.f32.mrb[0].mxu0
    %v796 = vadd.f32 %v667, %v795
    %v797 = vpop.f32.mrb[0].mxu0
    %798 = vmatprep.mubr.bf16.mxu0 0
    %799 = vmatmul.mubr.bf16.gmra.mrb[0].mxu0 %v713
    %v800 = vpop.f32.mrb[0].mxu0
    %v801 = vadd.f32 %v667, %v800
    %v802 = vpop.f32.mrb[0].mxu0
    %v803 = vpop.f32.mrb[0].mxu0
    %v804 = vadd.f32 %v667, %v803
    %v805 = vpop.f32.mrb[0].mxu0
    %806 = vmatprep.mubr.bf16.mxu0 0
    %807 = vmatmul.mubr.bf16.gmra.mrb[0].mxu0 %v716
    %v808 = vpop.f32.mrb[0].mxu0
    %v809 = vadd.f32 %v667, %v808
    %v810 = vpop.f32.mrb[0].mxu0
    %v811 = vpop.f32.mrb[0].mxu0
    %v812 = vadd.f32 %v667, %v811
    %v813 = vpop.f32.mrb[0].mxu0
    %814 = vdwg.mxu0
    %v815 = vmax.f32 %v753, 0.0
    %v816 = vmax.f32 %v756, 0.0
    %v817 = vmax.f32 %v761, 0.0
    %v818 = vmax.f32 %v764, 0.0
    %v819 = vmax.f32 %v769, 0.0
    %v820 = vmax.f32 %v772, 0.0
    %v821 = vmax.f32 %v777, 0.0
    %v822 = vmax.f32 %v780, 0.0
    %v823 = vmax.f32 %v785, 0.0
    %v824 = vmax.f32 %v788, 0.0
    %v825 = vmax.f32 %v793, 0.0
    %v826 = vmax.f32 %v796, 0.0
    %v827 = vmax.f32 %v801, 0.0
    %v828 = vmax.f32 %v804, 0.0
    %v829 = vmax.f32 %v809, 0.0
    %v830 = vmax.f32 %v812, 0.0
    %v831 = vld [vmem:[%s7] sm:$0x1]
    %v832 = vpack.c.bf16 %v816, %v815
    %v833 = vpack.c.bf16 %v818, %v817
    %v834 = vpack.c.bf16 %v820, %v819
    %v835 = vpack.c.bf16 %v822, %v821
    %v836 = vpack.c.bf16 %v824, %v823
    %v837 = vpack.c.bf16 %v826, %v825
    %v838 = vpack.c.bf16 %v828, %v827
    %v839 = vpack.c.bf16 %v830, %v829
    %v840 = vld [vmem:[#allocation2] sm:$0x1]
    %842 = vset.pattern.permute.xlu0 0
    %843 = vperm.xlu0 %842, %v840
    %v844 = vpop.permute.xlu0 %843
    %v846 = vlaneseq
    %v847 = vshrl.u32 %v846, 7
    %v848 = vsub.s32 0, %v847
    %v849 = vrot.slane %v844, %v848
    %v851 = vsel %vm693, %v831, 0
    %v854 = vsel %vm693, %v832, 0
    %v857 = vsel %vm693, %v833, 0
    %v860 = vsel %vm693, %v834, 0
    %v863 = vsel %vm693, %v835, 0
    %v866 = vsel %vm693, %v836, 0
    %v869 = vsel %vm693, %v837, 0
    %v872 = vsel %vm693, %v838, 0
    %v875 = vsel %vm693, %v839, 0
    %877 = vmatprep.subr.bf16.mxu0 0
    %878 = vmatpush1.bf16.xpose.msra.mxu0 %v854
    %879 = vmatprep.subr.bf16.mxu0 0
    %880 = vmatpush1.bf16.xpose.msra.mxu0 %v857
    %881 = vmatprep.subr.bf16.mxu0 0
    %882 = vmatpush1.bf16.xpose.msra.mxu0 %v860
    %883 = vmatprep.subr.bf16.mxu0 0
    %884 = vmatpush1.bf16.xpose.msra.mxu0 %v863
    %885 = vmatprep.subr.bf16.mxu0 0
    %886 = vmatpush1.bf16.xpose.msra.mxu0 %v866
    %887 = vmatprep.subr.bf16.mxu0 0
    %888 = vmatpush1.bf16.xpose.msra.mxu0 %v869
    %889 = vmatprep.subr.bf16.mxu0 0
    %890 = vmatpush1.bf16.xpose.msra.mxu0 %v872
    %891 = vmatprep.subr.bf16.mxu0 0
    %892 = vmatpush1.bf16.xpose.msra.mxu0 %v875
    %893 = vmatprep.subr.bf16.mxu0 0
    %894 = vmatpush1.bf16.xpose.msra.mxu0 0
    %895 = vmatprep.subr.bf16.mxu0 0
    %896 = vmatpush1.bf16.xpose.msra.mxu0 0
    %897 = vmatprep.subr.bf16.mxu0 0
    %898 = vmatpush1.bf16.xpose.msra.mxu0 0
    %899 = vmatprep.subr.bf16.mxu0 0
    %900 = vmatpush1.bf16.xpose.msra.mxu0 0
    %901 = vmatprep.subr.bf16.mxu0 0
    %902 = vmatpush1.bf16.xpose.msra.mxu0 0
    %903 = vmatprep.subr.bf16.mxu0 0
    %904 = vmatpush1.bf16.xpose.msra.mxu0 0
    %905 = vmatprep.subr.bf16.mxu0 0
    %906 = vmatpush1.bf16.xpose.msra.mxu0 0
    %907 = vmatprep.subr.bf16.mxu0 0
    %908 = vmatpush1.bf16.xpose.msra.mxu0 0
    %909 = vmatprep.mubr.bf16.mxu0 0
    %910 = vmatmul.mubr.bf16.gmra.mrb[0].mxu0 %v851
    %v911 = vpop.f32.mrb[0].mxu0
    %v912 = vadd.f32 %v849, %v911
    %v913 = vpop.f32.mrb[0].mxu0
    %v914 = vpop.f32.mrb[0].mxu0
    %v915 = vpop.f32.mrb[0].mxu0
    %916 = vdwg.mxu0
    %v917 = vmax.f32 %v912, 0.0
    %918 = vst [vmem:[#allocation3] sm:$0x1] %v917
    // Predicated region
    $region38: #{tpu_custom_call.1} parent=1 // pred_check
      _
    $region39: #{tpu_custom_call.1} parent=1 // pred_check_branch
      %920 = sbr.rel (0) target = $region41
    $region40: #{tpu_custom_call.1} parent=1 // pred_region
      %s922 = ssub.s32 16, 16
      %923 = vsyncadd [#allocation4], %s922
      %s925 = sshll.u32 [#allocation3], 4
      %s926 = int_to_ptr.vmem [resolvable:$true] %s925
      %928 = dma.vmem_to_hbm [thread:$0]  %s926, 16, %s9, [#allocation4]
    $region41: #{tpu_custom_call.1} parent=1 // pred_fallthru
      _
    // Predicated region
    $region42: #{tpu_custom_call.1} parent=1 // pred_check
      _
    $region43: #{tpu_custom_call.1} parent=1 // pred_check_branch
      %930 = sbr.rel (0) target = $region45
    $region44: #{tpu_custom_call.1} parent=1 // pred_region
      %931 = dma.done [#allocation4], 16
    $region45: #{tpu_custom_call.1} parent=1 // pred_fallthru
      _
    %932 = vsyncpa [#allocation4], 1

</llo_original>
